<compile_context>
chip_gen: v7x
topology: tpu7x:2x2x1
jax: 0.10.0
libtpu: 0.0.40
codegen_flags: <defaults>
</compile_context>

<pallas_src>
import jax
import jax.numpy as jnp
from jax.experimental import pallas as pl
from jax.experimental.pallas import tpu as pltpu


def _round_up(x, m):
    return (x + m - 1) // m * m


def _cdiv(a, b):
    return -(-a // b)


def _has_two_tensorcores():
    # v7x packs 2 TensorCores per chip; v5e/v6e have 1.  Best-effort detection:
    # only used to decide whether an even grid is worth rebalancing for.
    try:
        kind = jax.devices()[0].device_kind.lower()
    except Exception:
        return False
    return ("v7" in kind) or ("7x" in kind)


# -----------------------------------------------------------------------------
# Pallas kernel: fused adapter.L1 -> ReLU -> (adapter.L2 @ nar.L1 folded) ->
# ReLU -> classifier head.  3 chained MXU matmuls per row tile.
# -----------------------------------------------------------------------------
def _pipeline_kernel(x_ref,
                     w1_ref, b1_ref,     # adapter layer 1
                     w23_ref, b23_ref,   # folded adapter.L2 @ nar.L1
                     w4_ref, b4_ref,     # nar classifier head (lane padded)
                     o_ref):
    # x arrives f32 from HBM; cast to bf16 in-kernel (free under the MXU).
    x = x_ref[...].astype(jnp.bfloat16)

    # Hoist bias reads (each (1, dim) bias read exactly once per tile).
    b1 = b1_ref[...]
    b23 = b23_ref[...]
    b4 = b4_ref[...]

    # adapter.L1: bf16 dot, f32 accumulate, f32 bias + ReLU on the VPU.
    h = jnp.dot(x, w1_ref[...], preferred_element_type=jnp.float32) + b1
    h = jnp.maximum(h, 0.0)

    # folded adapter.L2 @ nar.L1 (no nonlinearity between them in the module).
    h = jnp.dot(h.astype(jnp.bfloat16), w23_ref[...],
                preferred_element_type=jnp.float32) + b23
    h = jnp.maximum(h, 0.0)

    # classifier head; store bf16 (lane-dense, half the writeback bytes).
    o_ref[...] = (jnp.dot(h.astype(jnp.bfloat16), w4_ref[...],
                          preferred_element_type=jnp.float32) + b4
                  ).astype(o_ref.dtype)


# -----------------------------------------------------------------------------
# One-time (model-load) parameter preparation: fold, lane-pad, cast.
# -----------------------------------------------------------------------------
def prepare_narce_params(params):
    w1, b1, w2, b2, w3, b3, w4, b4 = params
    D_in, H = w1.shape
    C = w4.shape[1]
    H_pad = _round_up(H, 128)
    C_pad = _round_up(C, 128)

    # Fold adapter.L2 and nar.L1 (frozen NAR, no activation between them).
    w23 = jnp.dot(w2, w3)                  # (H, H) f32
    b23 = jnp.dot(b2, w3) + b3             # (1, H) f32

    def pad2(a, rows, cols):
        return jnp.pad(a, ((0, rows - a.shape[0]), (0, cols - a.shape[1])))

    prepped = {
        "w1": pad2(w1, D_in, H_pad).astype(jnp.bfloat16),
        "b1": pad2(b1, 1, H_pad).astype(jnp.float32),
        "w23": pad2(w23, H_pad, H_pad).astype(jnp.bfloat16),
        "b23": pad2(b23, 1, H_pad).astype(jnp.float32),
        "w4": pad2(w4, H_pad, C_pad).astype(jnp.bfloat16),
        "b4": pad2(b4, 1, C_pad).astype(jnp.float32),
        "D_in": D_in, "H_pad": H_pad, "C": C, "C_pad": C_pad,
    }
    for k in ("w1", "b1", "w23", "b23", "w4", "b4"):
        prepped[k] = jax.block_until_ready(prepped[k])
    return prepped


# -----------------------------------------------------------------------------
# Per-call wrapper: only reshapes / row-pads x and launches the kernel.
# -----------------------------------------------------------------------------
def narce_pipeline_pallas(x, prepped, *, block_m=1024):
    """x: [B, T, D_in] float32 -> logits [B, T, C] float32."""
    B, T, D_in = x.shape
    assert D_in == prepped["D_in"]
    C, C_pad = prepped["C"], prepped["C_pad"]

    # ---- row tiling: balanced near-equal tiles, 16-row multiples (bf16 pack) ----
    M = B * T
    num_blocks = max(1, _cdiv(M, block_m))
    if _has_two_tensorcores() and num_blocks > 1 and num_blocks % 2 == 1:
        num_blocks += 1                      # even grid for 2 TCs, via rebalancing
    bm = _round_up(_cdiv(M, num_blocks), 16)
    M_pad = num_blocks * bm

    x2d = x.reshape(M, D_in)                 # no wrapper-side cast; kernel casts
    if M_pad != M:
        x2d = jnp.pad(x2d, ((0, M_pad - M), (0, 0)))

    def full_spec(shape):
        # Whole weight/bias resident in VMEM; constant block index across grid.
        return pl.BlockSpec(shape, lambda i: (0, 0))

    out2d = pl.pallas_call(
        _pipeline_kernel,
        out_shape=jax.ShapeDtypeStruct((M_pad, C_pad), jnp.bfloat16),
        grid=(num_blocks,),
        in_specs=[
            pl.BlockSpec((bm, D_in), lambda i: (i, 0)),        # x row tile (f32)
            full_spec(prepped["w1"].shape), full_spec(prepped["b1"].shape),
            full_spec(prepped["w23"].shape), full_spec(prepped["b23"].shape),
            full_spec(prepped["w4"].shape), full_spec(prepped["b4"].shape),
        ],
        out_specs=pl.BlockSpec((bm, C_pad), lambda i: (i, 0)),
        compiler_params=pltpu.CompilerParams(
            dimension_semantics=("parallel",),
            vmem_limit_bytes=32 * 1024 * 1024,
        ),
    )(x2d, prepped["w1"], prepped["b1"], prepped["w23"], prepped["b23"],
      prepped["w4"], prepped["b4"])

    # TODO(synk): downstream consumers could take the padded bf16 slab directly
    # and avoid this slice/cast copy; kept to match the module's [B,T,C] f32 output.
    return out2d[:M, :C].astype(jnp.float32).reshape(B, T, C)


# -----------------------------------------------------------------------------
# Pure-JAX references
# -----------------------------------------------------------------------------
def narce_pipeline_ref(x, params):
    """Full-f32 semantics of the PyTorch module (adapter(x) then nar(x))."""
    w1, b1, w2, b2, w3, b3, w4, b4 = params
    h = jnp.dot(x, w1) + b1
    h = jnp.maximum(h, 0.0)
    h = jnp.dot(h, w2) + b2
    h = jnp.dot(h, w3) + b3
    h = jnp.maximum(h, 0.0)
    return jnp.dot(h, w4) + b4


def narce_pipeline_ref_kernel_math(x, params):
    """Mirror of the kernel's math: folded W2@W3, bf16 dots / f32 acc, bf16 output."""
    w1, b1, w2, b2, w3, b3, w4, b4 = params
    w23 = jnp.dot(w2, w3)
    b23 = jnp.dot(b2, w3) + b3
    c = lambda a: a.astype(jnp.bfloat16)
    h = jnp.dot(c(x), c(w1), preferred_element_type=jnp.float32) + b1
    h = jnp.maximum(h, 0.0)
    h = jnp.dot(c(h), c(w23), preferred_element_type=jnp.float32) + b23
    h = jnp.maximum(h, 0.0)
    out = jnp.dot(c(h), c(w4), preferred_element_type=jnp.float32) + b4
    return out.astype(jnp.bfloat16).astype(jnp.float32)


# -----------------------------------------------------------------------------
# Deterministic parameter construction (shapes implied by __init__ components)
# -----------------------------------------------------------------------------
def make_params(key, d_in, hidden, n_classes):
    ks = jax.random.split(key, 8)

    def lin(kw, kb, fan_in, fan_out):
        w = jax.random.normal(kw, (fan_in, fan_out), jnp.float32) / jnp.sqrt(fan_in)
        b = jax.random.normal(kb, (1, fan_out), jnp.float32) * 0.01
        return w, b

    w1, b1 = lin(ks[0], ks[1], d_in, hidden)
    w2, b2 = lin(ks[2], ks[3], hidden, hidden)
    w3, b3 = lin(ks[4], ks[5], hidden, hidden)
    w4, b4 = lin(ks[6], ks[7], hidden, n_classes)
    return (w1, b1, w2, b2, w3, b3, w4, b4)


if __name__ == "__main__":
    B, T, D_IN, HIDDEN, N_CLASSES = 2, 8, 32, 64, 16

    key = jax.random.PRNGKey(0)
    kx, kp = jax.random.split(key)
    x = jax.random.normal(kx, (B, T, D_IN), jnp.float32)
    params = make_params(kp, D_IN, HIDDEN, N_CLASSES)

    prepped = prepare_narce_params(params)     # one-time weight fold / pad / cast

    out = narce_pipeline_pallas(x, prepped)
    out = jax.block_until_ready(out)
    assert out.shape == (B, T, N_CLASSES)

    # Tight check vs a reference mirroring the kernel's folded bf16/f32 math.
    ref_k = narce_pipeline_ref_kernel_math(x, params)
    assert jnp.allclose(out, ref_k, atol=2e-2, rtol=2e-2), "mismatch vs folded bf16 ref"

    # Sanity check vs the full-f32 PyTorch-equivalent semantics.
    ref_f32 = narce_pipeline_ref(x, params)
    assert jnp.allclose(out, ref_f32, atol=8e-2, rtol=8e-2), "mismatch vs f32 ref"

    print("KERNEL_OK")
</pallas_src>

<mosaic_0001>
module attributes {stable_mosaic.version = 11 : i64} {
  func.func @_pipeline_kernel(%arg0: i32, %arg1: memref<16x32xf32, #tpu.memory_space<vmem>>, %arg2: memref<32x128xbf16, #tpu.memory_space<vmem>>, %arg3: memref<1x128xf32, #tpu.memory_space<vmem>>, %arg4: memref<128x128xbf16, #tpu.memory_space<vmem>>, %arg5: memref<1x128xf32, #tpu.memory_space<vmem>>, %arg6: memref<128x128xbf16, #tpu.memory_space<vmem>>, %arg7: memref<1x128xf32, #tpu.memory_space<vmem>>, %arg8: memref<16x128xbf16, #tpu.memory_space<vmem>>) attributes {dimension_semantics = [#tpu.dimension_semantics<parallel>], iteration_bounds = array<i64: 1>, scalar_prefetch = 0 : i64, scratch_operands = 0 : i64, tpu.core_type = #tpu.core_type<tc>, window_params = [{transform_indices = @transform_0, window_bounds = array<i64: 16, 32>}, {pipeline_mode = #tpu.pipeline_mode<synchronous>, transform_indices = @transform_1, window_bounds = array<i64: 32, 128>}, {pipeline_mode = #tpu.pipeline_mode<synchronous>, transform_indices = @transform_2, window_bounds = array<i64: 1, 128>}, {pipeline_mode = #tpu.pipeline_mode<synchronous>, transform_indices = @transform_3, window_bounds = array<i64: 128, 128>}, {pipeline_mode = #tpu.pipeline_mode<synchronous>, transform_indices = @transform_4, window_bounds = array<i64: 1, 128>}, {pipeline_mode = #tpu.pipeline_mode<synchronous>, transform_indices = @transform_5, window_bounds = array<i64: 128, 128>}, {pipeline_mode = #tpu.pipeline_mode<synchronous>, transform_indices = @transform_6, window_bounds = array<i64: 1, 128>}, {transform_indices = @transform_7, window_bounds = array<i64: 16, 128>}]} {
    %c0 = arith.constant 0 : index
    %c0_0 = arith.constant 0 : index
    %0 = vector.load %arg1[%c0, %c0_0] : memref<16x32xf32, #tpu.memory_space<vmem>>, vector<16x32xf32>
    %1 = arith.truncf %0 : vector<16x32xf32> to vector<16x32xbf16>
    %c0_1 = arith.constant 0 : index
    %c0_2 = arith.constant 0 : index
    %2 = vector.load %arg3[%c0_1, %c0_2] : memref<1x128xf32, #tpu.memory_space<vmem>>, vector<1x128xf32>
    %c0_3 = arith.constant 0 : index
    %c0_4 = arith.constant 0 : index
    %3 = vector.load %arg5[%c0_3, %c0_4] : memref<1x128xf32, #tpu.memory_space<vmem>>, vector<1x128xf32>
    %c0_5 = arith.constant 0 : index
    %c0_6 = arith.constant 0 : index
    %4 = vector.load %arg7[%c0_5, %c0_6] : memref<1x128xf32, #tpu.memory_space<vmem>>, vector<1x128xf32>
    %c0_7 = arith.constant 0 : index
    %c0_8 = arith.constant 0 : index
    %5 = vector.load %arg2[%c0_7, %c0_8] : memref<32x128xbf16, #tpu.memory_space<vmem>>, vector<32x128xbf16>
    %cst = arith.constant dense<0.000000e+00> : vector<16x128xf32>
    %6 = tpu.matmul %1, %5, %cst {dimension_numbers = #tpu.dot_dimension_numbers<[1], [0], [0], [1], [0, 0, 1, 1], [], []>} : vector<16x32xbf16>, vector<32x128xbf16>, vector<16x128xf32> -> vector<16x128xf32>
    %7 = vector.broadcast %2 : vector<1x128xf32> to vector<16x128xf32>
    %8 = arith.addf %6, %7 : vector<16x128xf32>
    %cst_9 = arith.constant 0.000000e+00 : f32
    %9 = vector.broadcast %cst_9 : f32 to vector<16x128xf32>
    %10 = arith.maximumf %8, %9 : vector<16x128xf32>
    %11 = arith.truncf %10 : vector<16x128xf32> to vector<16x128xbf16>
    %c0_10 = arith.constant 0 : index
    %c0_11 = arith.constant 0 : index
    %12 = vector.load %arg4[%c0_10, %c0_11] : memref<128x128xbf16, #tpu.memory_space<vmem>>, vector<128x128xbf16>
    %cst_12 = arith.constant dense<0.000000e+00> : vector<16x128xf32>
    %13 = tpu.matmul %11, %12, %cst_12 {dimension_numbers = #tpu.dot_dimension_numbers<[1], [0], [0], [1], [0, 0, 1, 1], [], []>} : vector<16x128xbf16>, vector<128x128xbf16>, vector<16x128xf32> -> vector<16x128xf32>
    %14 = vector.broadcast %3 : vector<1x128xf32> to vector<16x128xf32>
    %15 = arith.addf %13, %14 : vector<16x128xf32>
    %cst_13 = arith.constant 0.000000e+00 : f32
    %16 = vector.broadcast %cst_13 : f32 to vector<16x128xf32>
    %17 = arith.maximumf %15, %16 : vector<16x128xf32>
    %18 = arith.truncf %17 : vector<16x128xf32> to vector<16x128xbf16>
    %c0_14 = arith.constant 0 : index
    %c0_15 = arith.constant 0 : index
    %19 = vector.load %arg6[%c0_14, %c0_15] : memref<128x128xbf16, #tpu.memory_space<vmem>>, vector<128x128xbf16>
    %cst_16 = arith.constant dense<0.000000e+00> : vector<16x128xf32>
    %20 = tpu.matmul %18, %19, %cst_16 {dimension_numbers = #tpu.dot_dimension_numbers<[1], [0], [0], [1], [0, 0, 1, 1], [], []>} : vector<16x128xbf16>, vector<128x128xbf16>, vector<16x128xf32> -> vector<16x128xf32>
    %21 = vector.broadcast %4 : vector<1x128xf32> to vector<16x128xf32>
    %22 = arith.addf %20, %21 : vector<16x128xf32>
    %23 = arith.truncf %22 : vector<16x128xf32> to vector<16x128xbf16>
    %c0_17 = arith.constant 0 : index
    %c0_18 = arith.constant 0 : index
    %24 = vector.load %arg8[%c0_17, %c0_18] : memref<16x128xbf16, #tpu.memory_space<vmem>>, vector<16x128xbf16>
    tpu.vector_store %arg8[%c0_17, %c0_18], %23 {strides = array<i32>} : memref<16x128xbf16, #tpu.memory_space<vmem>>, vector<16x128xbf16>,
    return
  }
  func.func @transform_0(%arg0: i32) -> (i32, i32) {
    %c0_i32 = arith.constant 0 : i32
    %c0_i32_0 = arith.constant 0 : i32
    return %arg0, %c0_i32 : i32, i32
  }
  func.func @transform_1(%arg0: i32) -> (i32, i32) {
    %c0_i32 = arith.constant 0 : i32
    %c0_i32_0 = arith.constant 0 : i32
    %c0_i32_1 = arith.constant 0 : i32
    return %c0_i32, %c0_i32_0 : i32, i32
  }
  func.func @transform_2(%arg0: i32) -> (i32, i32) {
    %c0_i32 = arith.constant 0 : i32
    %c0_i32_0 = arith.constant 0 : i32
    %c0_i32_1 = arith.constant 0 : i32
    return %c0_i32, %c0_i32_0 : i32, i32
  }
  func.func @transform_3(%arg0: i32) -> (i32, i32) {
    %c0_i32 = arith.constant 0 : i32
    %c0_i32_0 = arith.constant 0 : i32
    %c0_i32_1 = arith.constant 0 : i32
    return %c0_i32, %c0_i32_0 : i32, i32
  }
  func.func @transform_4(%arg0: i32) -> (i32, i32) {
    %c0_i32 = arith.constant 0 : i32
    %c0_i32_0 = arith.constant 0 : i32
    %c0_i32_1 = arith.constant 0 : i32
    return %c0_i32, %c0_i32_0 : i32, i32
  }
  func.func @transform_5(%arg0: i32) -> (i32, i32) {
    %c0_i32 = arith.constant 0 : i32
    %c0_i32_0 = arith.constant 0 : i32
    %c0_i32_1 = arith.constant 0 : i32
    return %c0_i32, %c0_i32_0 : i32, i32
  }
  func.func @transform_6(%arg0: i32) -> (i32, i32) {
    %c0_i32 = arith.constant 0 : i32
    %c0_i32_0 = arith.constant 0 : i32
    %c0_i32_1 = arith.constant 0 : i32
    return %c0_i32, %c0_i32_0 : i32, i32
  }
  func.func @transform_7(%arg0: i32) -> (i32, i32) {
    %c0_i32 = arith.constant 0 : i32
    %c0_i32_0 = arith.constant 0 : i32
    return %arg0, %c0_i32 : i32, i32
  }
}

</mosaic_0001>

<llo_original>
// kernel: tpu_custom_call.1
$region0: #{tpu_custom_call.1}
  #allocation0 [shape = 'u32[]', space=smem, size = 0x4, offset = 0x4, fixed_abs, tag = 'smem constant byte address 0x4 - core index']
  #allocation1 [shape = 'u32[144,128]{1,0:T(1,128)}', space=vmem, size = 0x12000, scoped, tag = 'internal scratch']
  %s0 = inlined_call_operand.hbm [shape: f32[16,32], index: 0, kind: input, shape index: {}]
  %s1 = inlined_call_operand.hbm [shape: bf16[32,128], index: 1, kind: input, shape index: {}]
  %s2 = inlined_call_operand.vmem [shape: f32[1,128], index: 2, kind: input, shape index: {}]
  %s3 = inlined_call_operand.hbm [shape: bf16[128,128], index: 3, kind: input, shape index: {}]
  %s4 = inlined_call_operand.vmem [shape: f32[1,128], index: 4, kind: input, shape index: {}]
  %s5 = inlined_call_operand.hbm [shape: bf16[128,128], index: 5, kind: input, shape index: {}]
  %s6 = inlined_call_operand.vmem [shape: f32[1,128], index: 6, kind: input, shape index: {}]
  %s7 = inlined_call_operand.hbm [shape: bf16[16,128], index: 7, kind: output, shape index: {}]
  %s8 = sld [smem:[#allocation0]]
  $region54: #{tpu_custom_call.1} parent=0
    _
  %s10 = ssub.s32 1, %s8
  %s11 = scalar_select 0, %s10, %s8
  $region1: #{tpu_custom_call.1} parent=0
    #allocation2 [shape = 'u8[8192]{0}', space=vmem, size = 0x2000, scoped, tag = 'input window, operand 0, single buffered']
    #allocation3 [shape = 's32[1]{0}', space=sflag, size = 0x4, scoped, tag = 'scoped memory for tpu_custom_call.1']
    #allocation4 [shape = 's32[1]{0}', space=sflag, size = 0x4, scoped, tag = 'scoped memory for tpu_custom_call.1']
    #allocation5 [shape = 'u8[8192]{0}', space=vmem, size = 0x2000, scoped, tag = 'input window, operand 1, single buffered']
    #allocation6 [shape = 's32[1]{0}', space=sflag, size = 0x4, scoped, tag = 'scoped memory for tpu_custom_call.1']
    #allocation7 [shape = 'u8[32768]{0}', space=vmem, size = 0x8000, scoped, tag = 'input window, operand 3, single buffered']
    #allocation8 [shape = 'u8[32768]{0}', space=vmem, size = 0x8000, scoped, tag = 'input window, operand 5, single buffered']
    #allocation9 [shape = 's32[1]{0}', space=sflag, size = 0x4, scoped, tag = 'scoped memory for tpu_custom_call.1']
    #allocation10 [shape = 'u8[4096]{0}', space=vmem, size = 0x1000, scoped, tag = 'output window, operand 0, single buffered']
    %12 = vsyncpa [#allocation3], 0
    %13 = vsyncpa [#allocation6], 0
    %14 = vsyncpa [#allocation9], 0
    %15 = vsyncpa [#allocation4], 0
    // Predicated region
    $region2: #{tpu_custom_call.1} parent=1 // pred_check
      _
    $region3: #{tpu_custom_call.1} parent=1 // pred_check_branch
      %17 = sbr.rel (0) target = $region5
    $region4: #{tpu_custom_call.1} parent=1 // pred_region
      %s19 = ssub.s32 256, 256
      %20 = vsyncadd [#allocation3], %s19
      %s21 = sshll.u32 [#allocation2], 4
      %s22 = int_to_ptr.vmem [resolvable:$true] %s21
      %27 = dma.hbm_to_vmem [thread:$0]  %s0, 256, %s22, [#allocation3], 128, 128, 8
    $region5: #{tpu_custom_call.1} parent=1 // pred_fallthru
      _
    // Predicated region
    $region6: #{tpu_custom_call.1} parent=1 // pred_check
      _
    $region7: #{tpu_custom_call.1} parent=1 // pred_check_branch
      %29 = sbr.rel (0) target = $region9
    $region8: #{tpu_custom_call.1} parent=1 // pred_region
      %s31 = ssub.s32 256, 256
      %32 = vsyncadd [#allocation6], %s31
      %s33 = sshll.u32 [#allocation5], 4
      %s34 = int_to_ptr.vmem [resolvable:$true] %s33
      %39 = dma.hbm_to_vmem [thread:$0]  %s1, 256, %s34, [#allocation6], 64, 64, 4
    $region9: #{tpu_custom_call.1} parent=1 // pred_fallthru
      _
    // Predicated region
    $region10: #{tpu_custom_call.1} parent=1 // pred_check
      _
    $region11: #{tpu_custom_call.1} parent=1 // pred_check_branch
      %41 = sbr.rel (0) target = $region13
    $region12: #{tpu_custom_call.1} parent=1 // pred_region
      _
    $region13: #{tpu_custom_call.1} parent=1 // pred_fallthru
      _
    // Predicated region
    $region14: #{tpu_custom_call.1} parent=1 // pred_check
      _
    $region15: #{tpu_custom_call.1} parent=1 // pred_check_branch
      %43 = sbr.rel (0) target = $region17
    $region16: #{tpu_custom_call.1} parent=1 // pred_region
      %s45 = ssub.s32 1024, 1024
      %46 = vsyncadd [#allocation6], %s45
      %s47 = sshll.u32 [#allocation7], 4
      %s48 = int_to_ptr.vmem [resolvable:$true] %s47
      %53 = dma.hbm_to_vmem [thread:$0]  %s3, 1024, %s48, [#allocation6], 64, 64, 4
    $region17: #{tpu_custom_call.1} parent=1 // pred_fallthru
      _
    // Predicated region
    $region18: #{tpu_custom_call.1} parent=1 // pred_check
      _
    $region19: #{tpu_custom_call.1} parent=1 // pred_check_branch
      %55 = sbr.rel (0) target = $region21
    $region20: #{tpu_custom_call.1} parent=1 // pred_region
      _
    $region21: #{tpu_custom_call.1} parent=1 // pred_fallthru
      _
    // Predicated region
    $region22: #{tpu_custom_call.1} parent=1 // pred_check
      _
    $region23: #{tpu_custom_call.1} parent=1 // pred_check_branch
      %57 = sbr.rel (0) target = $region25
    $region24: #{tpu_custom_call.1} parent=1 // pred_region
      %s59 = ssub.s32 1024, 1024
      %60 = vsyncadd [#allocation9], %s59
      %s61 = sshll.u32 [#allocation8], 4
      %s62 = int_to_ptr.vmem [resolvable:$true] %s61
      %67 = dma.hbm_to_vmem [thread:$0]  %s5, 1024, %s62, [#allocation9], 64, 64, 4
    $region25: #{tpu_custom_call.1} parent=1 // pred_fallthru
      _
    // Predicated region
    $region26: #{tpu_custom_call.1} parent=1 // pred_check
      _
    $region27: #{tpu_custom_call.1} parent=1 // pred_check_branch
      %69 = sbr.rel (0) target = $region29
    $region28: #{tpu_custom_call.1} parent=1 // pred_region
      _
    $region29: #{tpu_custom_call.1} parent=1 // pred_fallthru
      _
    // Predicated region
    $region30: #{tpu_custom_call.1} parent=1 // pred_check
      _
    $region31: #{tpu_custom_call.1} parent=1 // pred_check_branch
      %71 = sbr.rel (0) target = $region33
    $region32: #{tpu_custom_call.1} parent=1 // pred_region
      %72 = dma.done [#allocation3], 256
    $region33: #{tpu_custom_call.1} parent=1 // pred_fallthru
      _
    // Predicated region
    $region34: #{tpu_custom_call.1} parent=1 // pred_check
      _
    $region35: #{tpu_custom_call.1} parent=1 // pred_check_branch
      %74 = sbr.rel (0) target = $region37
    $region36: #{tpu_custom_call.1} parent=1 // pred_region
      %75 = dma.done [#allocation6], 256
    $region37: #{tpu_custom_call.1} parent=1 // pred_fallthru
      _
    // Predicated region
    $region38: #{tpu_custom_call.1} parent=1 // pred_check
      _
    $region39: #{tpu_custom_call.1} parent=1 // pred_check_branch
      %77 = sbr.rel (0) target = $region41
    $region40: #{tpu_custom_call.1} parent=1 // pred_region
      %78 = dma.done [#allocation6], 1024
    $region41: #{tpu_custom_call.1} parent=1 // pred_fallthru
      _
    // Predicated region
    $region42: #{tpu_custom_call.1} parent=1 // pred_check
      _
    $region43: #{tpu_custom_call.1} parent=1 // pred_check_branch
      %80 = sbr.rel (0) target = $region45
    $region44: #{tpu_custom_call.1} parent=1 // pred_region
      %81 = dma.done [#allocation9], 1024
    $region45: #{tpu_custom_call.1} parent=1 // pred_fallthru
      _
    %v83 = vld [vmem:[#allocation2] sm:$0xff]
    %v84 = vld [vmem:[#allocation2 + $0x8] sm:$0xff]
    %v85 = vpack.c.bf16 %v84, %v83
    %v86 = vld [vmem:[%s2] sm:$0x1]
    %v87 = vld [vmem:[%s4] sm:$0x1]
    %v88 = vld [vmem:[%s6] sm:$0x1]
    %v89 = vld [vmem:[#allocation5] sm:$0xf]
    %v90 = vld [vmem:[#allocation5 + $0x4] sm:$0xf]
    %v91 = vld [vmem:[#allocation5 + $0x8] sm:$0xf]
    %v92 = vld [vmem:[#allocation5 + $0xc] sm:$0xf]
    %v94 = vlaneseq
    %v95 = vshrl.u32 %v94, 7
    %v96 = vsub.s32 0, %v95
    %v97 = vrot.slane %v86, %v96
    %v103 = vunpack.c.l.b16 %v89
    %v104 = vunpack.c.l.b16 %v90
    %v105 = vunpack.c.l.b16 %v91
    %v106 = vunpack.c.l.b16 %v92
    %v107 = vpack.c.b16 %v104, %v103
    %v108 = vpack.c.b16 %v106, %v105
    %vm111 = vcmask 261120
    %v113 = vsel %vm111, %v85, 0
    %115 = vmatprep.subr.bf16.mxu0 0
    %116 = vmatpush1.bf16.msra.mxu0 %v107
    %117 = vmatprep.subr.bf16.mxu0 0
    %118 = vmatpush1.bf16.msra.mxu0 %v108
    %119 = vmatprep.subr.bf16.mxu0 0
    %120 = vmatpush1.bf16.msra.mxu0 0
    %121 = vmatprep.subr.bf16.mxu0 0
    %122 = vmatpush1.bf16.msra.mxu0 0
    %123 = vmatprep.subr.bf16.mxu0 0
    %124 = vmatpush1.bf16.msra.mxu0 0
    %125 = vmatprep.subr.bf16.mxu0 0
    %126 = vmatpush1.bf16.msra.mxu0 0
    %127 = vmatprep.subr.bf16.mxu0 0
    %128 = vmatpush1.bf16.msra.mxu0 0
    %129 = vmatprep.subr.bf16.mxu0 0
    %130 = vmatpush1.bf16.msra.mxu0 0
    %131 = vmatprep.subr.bf16.mxu0 0
    %132 = vmatpush1.bf16.msra.mxu0 0
    %133 = vmatprep.subr.bf16.mxu0 0
    %134 = vmatpush1.bf16.msra.mxu0 0
    %135 = vmatprep.subr.bf16.mxu0 0
    %136 = vmatpush1.bf16.msra.mxu0 0
    %137 = vmatprep.subr.bf16.mxu0 0
    %138 = vmatpush1.bf16.msra.mxu0 0
    %139 = vmatprep.subr.bf16.mxu0 0
    %140 = vmatpush1.bf16.msra.mxu0 0
    %141 = vmatprep.subr.bf16.mxu0 0
    %142 = vmatpush1.bf16.msra.mxu0 0
    %143 = vmatprep.subr.bf16.mxu0 0
    %144 = vmatpush1.bf16.msra.mxu0 0
    %145 = vmatprep.subr.bf16.mxu0 0
    %146 = vmatpush1.bf16.msra.mxu0 0
    %147 = vmatprep.mubr.bf16.mxu0 0
    %148 = vmatmul.mubr.bf16.gmra.mrb[0].mxu0 %v113
    %v149 = vpop.f32.mrb[0].mxu0
    %v150 = vadd.f32 %v97, %v149
    %v151 = vpop.f32.mrb[0].mxu0
    %v152 = vpop.f32.mrb[0].mxu0
    %v153 = vadd.f32 %v97, %v152
    %v154 = vpop.f32.mrb[0].mxu0
    %155 = vdwg.mxu0
    %v156 = vmax.f32 %v150, 0.0
    %v157 = vmax.f32 %v153, 0.0
    %v158 = vpack.c.bf16 %v157, %v156
    %v159 = vld [vmem:[#allocation7] sm:$0xf]
    %v160 = vld [vmem:[#allocation7 + $0x4] sm:$0xf]
    %v161 = vld [vmem:[#allocation7 + $0x8] sm:$0xf]
    %v162 = vld [vmem:[#allocation7 + $0xc] sm:$0xf]
    %v163 = vld [vmem:[#allocation7 + $0x10] sm:$0xf]
    %v164 = vld [vmem:[#allocation7 + $0x14] sm:$0xf]
    %v165 = vld [vmem:[#allocation7 + $0x18] sm:$0xf]
    %v166 = vld [vmem:[#allocation7 + $0x1c] sm:$0xf]
    %v167 = vld [vmem:[#allocation7 + $0x20] sm:$0xf]
    %v168 = vld [vmem:[#allocation7 + $0x24] sm:$0xf]
    %v169 = vld [vmem:[#allocation7 + $0x28] sm:$0xf]
    %v170 = vld [vmem:[#allocation7 + $0x2c] sm:$0xf]
    %v171 = vld [vmem:[#allocation7 + $0x30] sm:$0xf]
    %v172 = vld [vmem:[#allocation7 + $0x34] sm:$0xf]
    %v173 = vld [vmem:[#allocation7 + $0x38] sm:$0xf]
    %v174 = vld [vmem:[#allocation7 + $0x3c] sm:$0xf]
    %v176 = vlaneseq
    %v177 = vshrl.u32 %v176, 7
    %v178 = vsub.s32 0, %v177
    %v179 = vrot.slane %v87, %v178
    %v197 = vunpack.c.l.b16 %v159
    %v198 = vunpack.c.l.b16 %v160
    %v199 = vunpack.c.l.b16 %v161
    %v200 = vunpack.c.l.b16 %v162
    %v201 = vunpack.c.l.b16 %v163
    %v202 = vunpack.c.l.b16 %v164
    %v203 = vunpack.c.l.b16 %v165
    %v204 = vunpack.c.l.b16 %v166
    %v205 = vunpack.c.l.b16 %v167
    %v206 = vunpack.c.l.b16 %v168
    %v207 = vunpack.c.l.b16 %v169
    %v208 = vunpack.c.l.b16 %v170
    %v209 = vunpack.c.l.b16 %v171
    %v210 = vunpack.c.l.b16 %v172
    %v211 = vunpack.c.l.b16 %v173
    %v212 = vunpack.c.l.b16 %v174
    %v213 = vpack.c.b16 %v198, %v197
    %v214 = vpack.c.b16 %v200, %v199
    %v215 = vpack.c.b16 %v202, %v201
    %v216 = vpack.c.b16 %v204, %v203
    %v217 = vpack.c.b16 %v206, %v205
    %v218 = vpack.c.b16 %v208, %v207
    %v219 = vpack.c.b16 %v210, %v209
    %v220 = vpack.c.b16 %v212, %v211
    %229 = vmatprep.subr.bf16.mxu0 0
    %230 = vmatpush1.bf16.msra.mxu0 %v213
    %231 = vmatprep.subr.bf16.mxu0 0
    %232 = vmatpush1.bf16.msra.mxu0 %v214
    %233 = vmatprep.subr.bf16.mxu0 0
    %234 = vmatpush1.bf16.msra.mxu0 %v215
    %235 = vmatprep.subr.bf16.mxu0 0
    %236 = vmatpush1.bf16.msra.mxu0 %v216
    %237 = vmatprep.subr.bf16.mxu0 0
    %238 = vmatpush1.bf16.msra.mxu0 %v217
    %239 = vmatprep.subr.bf16.mxu0 0
    %240 = vmatpush1.bf16.msra.mxu0 %v218
    %241 = vmatprep.subr.bf16.mxu0 0
    %242 = vmatpush1.bf16.msra.mxu0 %v219
    %243 = vmatprep.subr.bf16.mxu0 0
    %244 = vmatpush1.bf16.msra.mxu0 %v220
    %245 = vmatprep.subr.bf16.mxu0 0
    %246 = vmatpush1.bf16.msra.mxu0 0
    %247 = vmatprep.subr.bf16.mxu0 0
    %248 = vmatpush1.bf16.msra.mxu0 0
    %249 = vmatprep.subr.bf16.mxu0 0
    %250 = vmatpush1.bf16.msra.mxu0 0
    %251 = vmatprep.subr.bf16.mxu0 0
    %252 = vmatpush1.bf16.msra.mxu0 0
    %253 = vmatprep.subr.bf16.mxu0 0
    %254 = vmatpush1.bf16.msra.mxu0 0
    %255 = vmatprep.subr.bf16.mxu0 0
    %256 = vmatpush1.bf16.msra.mxu0 0
    %257 = vmatprep.subr.bf16.mxu0 0
    %258 = vmatpush1.bf16.msra.mxu0 0
    %259 = vmatprep.subr.bf16.mxu0 0
    %260 = vmatpush1.bf16.msra.mxu0 0
    %261 = vmatprep.mubr.bf16.mxu0 0
    %262 = vmatmul.mubr.bf16.gmra.mrb[0].mxu0 %v158
    %v263 = vpop.f32.mrb[0].mxu0
    %v264 = vadd.f32 %v179, %v263
    %v265 = vpop.f32.mrb[0].mxu0
    %v266 = vpop.f32.mrb[0].mxu0
    %v267 = vadd.f32 %v179, %v266
    %v268 = vpop.f32.mrb[0].mxu0
    %269 = vdwg.mxu0
    %v270 = vmax.f32 %v264, 0.0
    %v271 = vmax.f32 %v267, 0.0
    %v272 = vpack.c.bf16 %v271, %v270
    %v273 = vld [vmem:[#allocation8] sm:$0xf]
    %v274 = vld [vmem:[#allocation8 + $0x4] sm:$0xf]
    %v275 = vld [vmem:[#allocation8 + $0x8] sm:$0xf]
    %v276 = vld [vmem:[#allocation8 + $0xc] sm:$0xf]
    %v277 = vld [vmem:[#allocation8 + $0x10] sm:$0xf]
    %v278 = vld [vmem:[#allocation8 + $0x14] sm:$0xf]
    %v279 = vld [vmem:[#allocation8 + $0x18] sm:$0xf]
    %v280 = vld [vmem:[#allocation8 + $0x1c] sm:$0xf]
    %v281 = vld [vmem:[#allocation8 + $0x20] sm:$0xf]
    %v282 = vld [vmem:[#allocation8 + $0x24] sm:$0xf]
    %v283 = vld [vmem:[#allocation8 + $0x28] sm:$0xf]
    %v284 = vld [vmem:[#allocation8 + $0x2c] sm:$0xf]
    %v285 = vld [vmem:[#allocation8 + $0x30] sm:$0xf]
    %v286 = vld [vmem:[#allocation8 + $0x34] sm:$0xf]
    %v287 = vld [vmem:[#allocation8 + $0x38] sm:$0xf]
    %v288 = vld [vmem:[#allocation8 + $0x3c] sm:$0xf]
    %v290 = vlaneseq
    %v291 = vshrl.u32 %v290, 7
    %v292 = vsub.s32 0, %v291
    %v293 = vrot.slane %v88, %v292
    %v311 = vunpack.c.l.b16 %v273
    %v312 = vunpack.c.l.b16 %v274
    %v313 = vunpack.c.l.b16 %v275
    %v314 = vunpack.c.l.b16 %v276
    %v315 = vunpack.c.l.b16 %v277
    %v316 = vunpack.c.l.b16 %v278
    %v317 = vunpack.c.l.b16 %v279
    %v318 = vunpack.c.l.b16 %v280
    %v319 = vunpack.c.l.b16 %v281
    %v320 = vunpack.c.l.b16 %v282
    %v321 = vunpack.c.l.b16 %v283
    %v322 = vunpack.c.l.b16 %v284
    %v323 = vunpack.c.l.b16 %v285
    %v324 = vunpack.c.l.b16 %v286
    %v325 = vunpack.c.l.b16 %v287
    %v326 = vunpack.c.l.b16 %v288
    %v327 = vpack.c.b16 %v312, %v311
    %v328 = vpack.c.b16 %v314, %v313
    %v329 = vpack.c.b16 %v316, %v315
    %v330 = vpack.c.b16 %v318, %v317
    %v331 = vpack.c.b16 %v320, %v319
    %v332 = vpack.c.b16 %v322, %v321
    %v333 = vpack.c.b16 %v324, %v323
    %v334 = vpack.c.b16 %v326, %v325
    %343 = vmatprep.subr.bf16.mxu0 0
    %344 = vmatpush1.bf16.msra.mxu0 %v327
    %345 = vmatprep.subr.bf16.mxu0 0
    %346 = vmatpush1.bf16.msra.mxu0 %v328
    %347 = vmatprep.subr.bf16.mxu0 0
    %348 = vmatpush1.bf16.msra.mxu0 %v329
    %349 = vmatprep.subr.bf16.mxu0 0
    %350 = vmatpush1.bf16.msra.mxu0 %v330
    %351 = vmatprep.subr.bf16.mxu0 0
    %352 = vmatpush1.bf16.msra.mxu0 %v331
    %353 = vmatprep.subr.bf16.mxu0 0
    %354 = vmatpush1.bf16.msra.mxu0 %v332
    %355 = vmatprep.subr.bf16.mxu0 0
    %356 = vmatpush1.bf16.msra.mxu0 %v333
    %357 = vmatprep.subr.bf16.mxu0 0
    %358 = vmatpush1.bf16.msra.mxu0 %v334
    %359 = vmatprep.subr.bf16.mxu0 0
    %360 = vmatpush1.bf16.msra.mxu0 0
    %361 = vmatprep.subr.bf16.mxu0 0
    %362 = vmatpush1.bf16.msra.mxu0 0
    %363 = vmatprep.subr.bf16.mxu0 0
    %364 = vmatpush1.bf16.msra.mxu0 0
    %365 = vmatprep.subr.bf16.mxu0 0
    %366 = vmatpush1.bf16.msra.mxu0 0
    %367 = vmatprep.subr.bf16.mxu0 0
    %368 = vmatpush1.bf16.msra.mxu0 0
    %369 = vmatprep.subr.bf16.mxu0 0
    %370 = vmatpush1.bf16.msra.mxu0 0
    %371 = vmatprep.subr.bf16.mxu0 0
    %372 = vmatpush1.bf16.msra.mxu0 0
    %373 = vmatprep.subr.bf16.mxu0 0
    %374 = vmatpush1.bf16.msra.mxu0 0
    %375 = vmatprep.mubr.bf16.mxu0 0
    %376 = vmatmul.mubr.bf16.gmra.mrb[0].mxu0 %v272
    %v377 = vpop.f32.mrb[0].mxu0
    %v378 = vadd.f32 %v293, %v377
    %v379 = vpop.f32.mrb[0].mxu0
    %v380 = vpop.f32.mrb[0].mxu0
    %v381 = vadd.f32 %v293, %v380
    %v382 = vpop.f32.mrb[0].mxu0
    %383 = vdwg.mxu0
    %v384 = vpack.c.bf16 %v381, %v378
    %v386 = vunpack.c.l.b16 %v384
    %v387 = vunpack.c.h.b16 %v384
    %v388 = vpack.c.b16 %v386, %v386
    %v389 = vpack.c.b16 %v387, %v387
    %392 = vst [vmem:[#allocation10] sm:$0xf] %v388
    %393 = vst [vmem:[#allocation10 + $0x4] sm:$0xf] %v389
    // Predicated region
    $region46: #{tpu_custom_call.1} parent=1 // pred_check
      _
    $region47: #{tpu_custom_call.1} parent=1 // pred_check_branch
      %395 = sbr.rel (0) target = $region49
    $region48: #{tpu_custom_call.1} parent=1 // pred_region
      %s397 = ssub.s32 128, 128
      %398 = vsyncadd [#allocation4], %s397
      %s399 = sshll.u32 [#allocation10], 4
      %s400 = int_to_ptr.vmem [resolvable:$true] %s399
      %405 = dma.vmem_to_hbm [thread:$0]  %s400, 128, %s7, [#allocation4], 64, 64, 4
    $region49: #{tpu_custom_call.1} parent=1 // pred_fallthru
      _
    // Predicated region
    $region50: #{tpu_custom_call.1} parent=1 // pred_check
      _
    $region51: #{tpu_custom_call.1} parent=1 // pred_check_branch
      %407 = sbr.rel (0) target = $region53
    $region52: #{tpu_custom_call.1} parent=1 // pred_region
      %408 = dma.done [#allocation4], 128
    $region53: #{tpu_custom_call.1} parent=1 // pred_fallthru
      _
    %409 = vsyncpa [#allocation3], 1
    %410 = vsyncpa [#allocation6], 1
    %411 = vsyncpa [#allocation9], 1
    %412 = vsyncpa [#allocation4], 1

</llo_original>
